<compile_context>
chip_gen: v5e
topology: v5e:2x2
jax: 0.10.0
libtpu: 0.0.40
codegen_flags: <defaults>
</compile_context>

<pallas_src>
import jax
import jax.numpy as jnp
from jax.experimental import pallas as pl
from jax.experimental.pallas import tpu as pltpu

_BN_EPS = 1e-5                      # PyTorch BatchNorm2d default eps
_MATMUL_DTYPE = jnp.bfloat16        # MXU input dtype (accumulation stays f32)
_LANE = 128


def _round_up(x, m):
    return ((x + m - 1) // m) * m


def _vmem_limit_bytes():
    """Generation-aware scoped-VMEM request (<= half of physical, <= 64 MiB)."""
    cap = 64 * 1024 * 1024
    try:
        info = pltpu.get_tpu_info()
        cap = int(getattr(info, "vmem_capacity_bytes", cap))
    except Exception:
        pass
    return max(16 * 1024 * 1024, min(cap // 2, 64 * 1024 * 1024))


def _pick_tile_m(M, C, vmem_limit):
    """Lane tile along the flattened frequency axis (multiple of 128).

    Budgets the double-buffered streamed blocks of the apply phase
    (xr/xi bf16 in, zr/zi f32 out, cwr/cwi bf16 in) plus the resident
    (C, C) bf16 weight pair and (C, 4) affine, against 75% of the VMEM limit.
    """
    per_col = 32 * C                               # bytes per lane column, 2-buffered
    resident = 2 * (C * C * 2) * 2 + C * 4 * 4 * 2
    budget = int(vmem_limit * 0.75) - resident
    tm = max(_LANE, (budget // per_col) // _LANE * _LANE)
    tm = min(tm, 2048)                             # lifted cap (was 512)
    return min(tm, _round_up(M, _LANE))


def _stats_kernel(xr_ref, xi_ref, wr_ref, wi_ref, stats_ref):
    """Phase 1: per-batch per-channel sum / sum-of-squares of conv1x1(x).

    x blocks are (1, C, TM); weights (C, C); stats_ref is a (1, C, 4) block of
    the (B, C, 4) output, resident across the frequency-tile (arbitrary) axis:
    [sum_r, sumsq_r, sum_i, sumsq_i].  Zero-padded frequency columns contribute
    exactly 0 (no bias is added inside the kernel).
    """
    @pl.when(pl.program_id(1) == 0)
    def _init():
        stats_ref[...] = jnp.zeros_like(stats_ref)

    yr = jnp.dot(wr_ref[...], xr_ref[0], preferred_element_type=jnp.float32)
    yi = jnp.dot(wi_ref[...], xi_ref[0], preferred_element_type=jnp.float32)

    partial = jnp.concatenate(
        [jnp.sum(yr, axis=1, keepdims=True),
         jnp.sum(yr * yr, axis=1, keepdims=True),
         jnp.sum(yi, axis=1, keepdims=True),
         jnp.sum(yi * yi, axis=1, keepdims=True)], axis=1)      # (C, 4)
    stats_ref[0] += partial                                     # single RMW per step


def _apply_kernel(xr_ref, xi_ref, wr_ref, wi_ref, aff_ref, cwr_ref, cwi_ref,
                  zr_ref, zi_ref):
    """Phase 2: conv1x1 (recomputed) + BN-affine + ReLU + complex gating."""
    yr = jnp.dot(wr_ref[...], xr_ref[0], preferred_element_type=jnp.float32)
    yi = jnp.dot(wi_ref[...], xi_ref[0], preferred_element_type=jnp.float32)

    # Per-channel BatchNorm folded into a single scale/shift (conv bias cancels).
    yr = jnp.maximum(yr * aff_ref[:, 0:1] + aff_ref[:, 1:2], 0.0)
    yi = jnp.maximum(yi * aff_ref[:, 2:3] + aff_ref[:, 3:4], 0.0)

    cwr = cwr_ref[...].astype(jnp.float32)   # complex_weight stored bf16 in HBM
    cwi = cwi_ref[...].astype(jnp.float32)
    zr_ref[0] = yr * cwr - yi * cwi
    zi_ref[0] = yr * cwi + yi * cwr


def _stats_call(xr, xi, wr, wi, tm, vmem_limit):
    B, C, Mp = xr.shape
    # Reduction (frequency-tile) axis innermost/"arbitrary"; batch axis
    # "parallel" so v7x shards the stats pass across its two TensorCores.
    grid = (B, Mp // tm)
    x_spec = pl.BlockSpec((1, C, tm), lambda b, t: (b, 0, t))
    w_spec = pl.BlockSpec((C, C), lambda b, t: (0, 0))
    return pl.pallas_call(
        _stats_kernel,
        grid=grid,
        in_specs=[x_spec, x_spec, w_spec, w_spec],
        out_specs=pl.BlockSpec((1, C, 4), lambda b, t: (b, 0, 0)),
        out_shape=jax.ShapeDtypeStruct((B, C, 4), jnp.float32),
        compiler_params=pltpu.CompilerParams(
            dimension_semantics=("parallel", "arbitrary"),
            vmem_limit_bytes=vmem_limit),
    )(xr, xi, wr, wi)


def _apply_call(xr, xi, wr, wi, affine, cwr, cwi, tm, vmem_limit):
    B, C, Mp = xr.shape
    # Batch innermost: cwr/cwi block index is constant across consecutive
    # b-steps, so the complex_weight tile is DMA'd once per frequency tile.
    grid = (Mp // tm, B)
    x_spec = pl.BlockSpec((1, C, tm), lambda t, b: (b, 0, t))
    w_spec = pl.BlockSpec((C, C), lambda t, b: (0, 0))
    aff_spec = pl.BlockSpec((C, 4), lambda t, b: (0, 0))
    cw_spec = pl.BlockSpec((C, tm), lambda t, b: (0, t))
    z_spec = pl.BlockSpec((1, C, tm), lambda t, b: (b, 0, t))
    z_shape = jax.ShapeDtypeStruct((B, C, Mp), jnp.float32)
    return pl.pallas_call(
        _apply_kernel,
        grid=grid,
        in_specs=[x_spec, x_spec, w_spec, w_spec, aff_spec, cw_spec, cw_spec],
        out_specs=(z_spec, z_spec),
        out_shape=(z_shape, z_shape),
        compiler_params=pltpu.CompilerParams(
            dimension_semantics=("parallel", "parallel"),
            vmem_limit_bytes=vmem_limit),
    )(xr, xi, wr, wi, affine, cwr, cwi)


def init_params(dim, h, w, key):
    """Deterministic synthetic parameters matching the module's __init__ shapes."""
    w_half = w // 2 + 1
    ks = jax.random.split(key, 5)
    return dict(
        complex_weight=jax.random.normal(ks[0], (h, w_half, dim, 2), jnp.float32) * 0.02,
        conv_real_w=jax.random.normal(ks[1], (dim, dim, 1, 1), jnp.float32) * 0.1,
        conv_real_b=jax.random.normal(ks[2], (dim,), jnp.float32) * 0.1,
        conv_imag_w=jax.random.normal(ks[3], (dim, dim, 1, 1), jnp.float32) * 0.1,
        conv_imag_b=jax.random.normal(ks[4], (dim,), jnp.float32) * 0.1,
        bn1_gamma=jnp.ones((dim,), jnp.float32),
        bn1_beta=jnp.zeros((dim,), jnp.float32),
        bn2_gamma=jnp.ones((dim,), jnp.float32),
        bn2_beta=jnp.zeros((dim,), jnp.float32),
    )


def spectral_gating_forward(x, params, *, tile_m=None):
    """x: (B, C, b, a) NCHW -> (B, C, b, a), matching the PyTorch module in
    training mode (batch statistics for the two BatchNorm2d layers)."""
    B, C, bdim, adim = x.shape
    w_half = bdim // 2 + 1
    M = adim * w_half

    # TODO(synk): rfft2/irfft2 have no Pallas TPU primitive; kept as jnp glue.
    xp = jnp.transpose(x, (0, 3, 2, 1)).astype(jnp.float32)           # (B, a, b, C)
    xf = jnp.fft.rfft2(xp, axes=(1, 2), norm='ortho')                 # (B, a, w_half, C)
    xr = jnp.transpose(jnp.real(xf), (0, 3, 1, 2)).reshape(B, C, M)   # lane-dense (B,C,M)
    xi = jnp.transpose(jnp.imag(xf), (0, 3, 1, 2)).reshape(B, C, M)

    vmem_limit = _vmem_limit_bytes()
    tm = _pick_tile_m(M, C, vmem_limit) if tile_m is None else tile_m
    assert tm % _LANE == 0, "tile_m must be a multiple of 128"
    Mp = _round_up(M, tm)
    if Mp != M:
        xr = jnp.pad(xr, ((0, 0), (0, 0), (0, Mp - M)))
        xi = jnp.pad(xi, ((0, 0), (0, 0), (0, Mp - M)))
    xr = xr.astype(_MATMUL_DTYPE)
    xi = xi.astype(_MATMUL_DTYPE)

    wr = params['conv_real_w'].reshape(C, C).astype(_MATMUL_DTYPE)    # (out, in)
    wi = params['conv_imag_w'].reshape(C, C).astype(_MATMUL_DTYPE)

    cw = params['complex_weight']                                     # (a, w_half, C, 2)
    cwr = jnp.transpose(cw[..., 0], (2, 0, 1)).reshape(C, M)
    cwi = jnp.transpose(cw[..., 1], (2, 0, 1)).reshape(C, M)
    if Mp != M:
        cwr = jnp.pad(cwr, ((0, 0), (0, Mp - M)))
        cwi = jnp.pad(cwi, ((0, 0), (0, Mp - M)))
    cwr = cwr.astype(_MATMUL_DTYPE)                                   # bf16 in HBM
    cwi = cwi.astype(_MATMUL_DTYPE)

    # Phase 1: per-batch partial per-channel statistics of conv1x1(x),
    # summed over the batch here (keeps the batch grid axis megacore-parallel).
    stats = _stats_call(xr, xi, wr, wi, tm, vmem_limit)               # (B, C, 4) f32
    stats = jnp.sum(stats, axis=0)                                    # (C, 4)
    count = jnp.float32(B * M)                                        # valid columns only
    mean_r = stats[:, 0] / count
    var_r = stats[:, 1] / count - mean_r * mean_r
    mean_i = stats[:, 2] / count
    var_i = stats[:, 3] / count - mean_i * mean_i
    sc_r = params['bn1_gamma'] * jax.lax.rsqrt(var_r + _BN_EPS)
    sh_r = params['bn1_beta'] - mean_r * sc_r
    sc_i = params['bn2_gamma'] * jax.lax.rsqrt(var_i + _BN_EPS)
    sh_i = params['bn2_beta'] - mean_i * sc_i
    affine = jnp.stack([sc_r, sh_r, sc_i, sh_i], axis=1).astype(jnp.float32)  # (C, 4)

    # Phase 2: conv1x1 + BN affine + ReLU + complex gating, streamed over tiles.
    zr, zi = _apply_call(xr, xi, wr, wi, affine, cwr, cwi, tm, vmem_limit)

    zr = zr[:, :, :M].reshape(B, C, adim, w_half)
    zi = zi[:, :, :M].reshape(B, C, adim, w_half)
    zf = jax.lax.complex(zr, zi).transpose(0, 2, 3, 1)                # (B, a, w_half, C)
    y = jnp.fft.irfft2(zf, s=(adim, bdim), axes=(1, 2), norm='ortho') # (B, a, b, C)
    return jnp.transpose(y, (0, 3, 2, 1))                             # (B, C, b, a)


def spectral_gating_reference(x, params):
    """Pure-JAX reference of the PyTorch forward (train-mode BN, bias included).
    Matmul inputs and complex_weight use the same bf16 precision as the kernel
    path so the comparison isolates structural correctness; the full-f32
    PyTorch module would differ by bf16 rounding only (bounded, ~0.4% rel)."""
    B, C, bdim, adim = x.shape
    xp = jnp.transpose(x, (0, 3, 2, 1)).astype(jnp.float32)
    xf = jnp.fft.rfft2(xp, axes=(1, 2), norm='ortho')                 # (B, a, w_half, C)
    xr = jnp.real(xf).astype(_MATMUL_DTYPE)
    xi = jnp.imag(xf).astype(_MATMUL_DTYPE)
    wr = params['conv_real_w'].reshape(C, C).astype(_MATMUL_DTYPE)
    wi = params['conv_imag_w'].reshape(C, C).astype(_MATMUL_DTYPE)
    yr = jnp.einsum('bhwc,oc->bhwo', xr, wr,
                    preferred_element_type=jnp.float32) + params['conv_real_b']
    yi = jnp.einsum('bhwc,oc->bhwo', xi, wi,
                    preferred_element_type=jnp.float32) + params['conv_imag_b']

    def bn_relu(y, gamma, beta):
        m = jnp.mean(y, axis=(0, 1, 2), keepdims=True)
        v = jnp.mean(y * y, axis=(0, 1, 2), keepdims=True) - m * m
        return jnp.maximum((y - m) * jax.lax.rsqrt(v + _BN_EPS) * gamma + beta, 0.0)

    yr = bn_relu(yr, params['bn1_gamma'], params['bn1_beta'])
    yi = bn_relu(yi, params['bn2_gamma'], params['bn2_beta'])

    cw = params['complex_weight'].astype(_MATMUL_DTYPE).astype(jnp.float32)
    zr = yr * cw[..., 0] - yi * cw[..., 1]
    zi = yr * cw[..., 1] + yi * cw[..., 0]
    zf = jax.lax.complex(zr, zi)
    y = jnp.fft.irfft2(zf, s=(adim, bdim), axes=(1, 2), norm='ortho')
    return jnp.transpose(y, (0, 3, 2, 1))


if __name__ == "__main__":
    # Small shapes consistent with the module: dim=16, h=w=16 -> input (B, dim, w, h).
    dim, h, w, B = 16, 16, 16, 2
    x = jax.random.normal(jax.random.PRNGKey(0), (B, dim, w, h), jnp.float32)
    params = init_params(dim, h, w, jax.random.PRNGKey(1))

    # tile_m=128 exercises multi-tile streaming, the padded frequency tail, the
    # batch-deduplicated complex_weight reads and the per-batch stats partials;
    # the default heuristic picks larger tiles on real shapes.
    out = jax.block_until_ready(spectral_gating_forward(x, params, tile_m=128))
    ref = jax.block_until_ready(spectral_gating_reference(x, params))

    assert out.shape == x.shape and out.dtype == jnp.float32
    assert jnp.allclose(out, ref, atol=2e-4, rtol=2e-3), \
        float(jnp.max(jnp.abs(out - ref)))
    print("KERNEL_OK")
</pallas_src>

<mosaic_0001>
module attributes {stable_mosaic.version = 11 : i64} {
  func.func @_stats_kernel(%arg0: i32, %arg1: i32, %arg2: memref<1x16x128xbf16, #tpu.memory_space<vmem>>, %arg3: memref<1x16x128xbf16, #tpu.memory_space<vmem>>, %arg4: memref<16x16xbf16, #tpu.memory_space<vmem>>, %arg5: memref<16x16xbf16, #tpu.memory_space<vmem>>, %arg6: memref<1x16x4xf32, #tpu.memory_space<vmem>>) attributes {dimension_semantics = [#tpu.dimension_semantics<parallel>, #tpu.dimension_semantics<arbitrary>], iteration_bounds = array<i64: 2, 2>, scalar_prefetch = 0 : i64, scratch_operands = 0 : i64, tpu.core_type = #tpu.core_type<tc>, window_params = [{transform_indices = @transform_0, window_bounds = array<i64: 1, 16, 128>}, {transform_indices = @transform_1, window_bounds = array<i64: 1, 16, 128>}, {pipeline_mode = #tpu.pipeline_mode<synchronous>, transform_indices = @transform_2, window_bounds = array<i64: 16, 16>}, {pipeline_mode = #tpu.pipeline_mode<synchronous>, transform_indices = @transform_3, window_bounds = array<i64: 16, 16>}, {transform_indices = @transform_4, window_bounds = array<i64: 1, 16, 4>}]} {
    %c0_i32 = arith.constant 0 : i32
    %0 = arith.cmpi eq, %arg1, %c0_i32 : i32
    %1 = arith.extui %0 : i1 to i32
    %c0_i32_0 = arith.constant 0 : i32
    %2 = arith.cmpi ne, %1, %c0_i32_0 : i32
    scf.if %2 {
      %cst_21 = arith.constant 0.000000e+00 : f32
      %28 = vector.broadcast %cst_21 : f32 to vector<1x16x4xf32>
      %c0_22 = arith.constant 0 : index
      %c0_23 = arith.constant 0 : index
      %c0_24 = arith.constant 0 : index
      %29 = vector.load %arg6[%c0_22, %c0_23, %c0_24] : memref<1x16x4xf32, #tpu.memory_space<vmem>>, vector<1x16x4xf32>
      tpu.vector_store %arg6[%c0_22, %c0_23, %c0_24], %28 {strides = array<i32>} : memref<1x16x4xf32, #tpu.memory_space<vmem>>, vector<1x16x4xf32>,
    } else {
    }
    %c0 = arith.constant 0 : index
    %c0_1 = arith.constant 0 : index
    %3 = vector.load %arg4[%c0, %c0_1] : memref<16x16xbf16, #tpu.memory_space<vmem>>, vector<16x16xbf16>
    %c0_2 = arith.constant 0 : index
    %c0_3 = arith.constant 0 : index
    %c0_4 = arith.constant 0 : index
    %4 = vector.load %arg2[%c0_2, %c0_3, %c0_4] : memref<1x16x128xbf16, #tpu.memory_space<vmem>>, vector<1x16x128xbf16>
    %5 = vector.shape_cast %4 : vector<1x16x128xbf16> to vector<16x128xbf16>
    %cst = arith.constant dense<0.000000e+00> : vector<16x128xf32>
    %6 = tpu.matmul %3, %5, %cst {dimension_numbers = #tpu.dot_dimension_numbers<[1], [0], [0], [1], [0, 0, 1, 1], [], []>} : vector<16x16xbf16>, vector<16x128xbf16>, vector<16x128xf32> -> vector<16x128xf32>
    %c0_5 = arith.constant 0 : index
    %c0_6 = arith.constant 0 : index
    %7 = vector.load %arg5[%c0_5, %c0_6] : memref<16x16xbf16, #tpu.memory_space<vmem>>, vector<16x16xbf16>
    %c0_7 = arith.constant 0 : index
    %c0_8 = arith.constant 0 : index
    %c0_9 = arith.constant 0 : index
    %8 = vector.load %arg3[%c0_7, %c0_8, %c0_9] : memref<1x16x128xbf16, #tpu.memory_space<vmem>>, vector<1x16x128xbf16>
    %9 = vector.shape_cast %8 : vector<1x16x128xbf16> to vector<16x128xbf16>
    %cst_10 = arith.constant dense<0.000000e+00> : vector<16x128xf32>
    %10 = tpu.matmul %7, %9, %cst_10 {dimension_numbers = #tpu.dot_dimension_numbers<[1], [0], [0], [1], [0, 0, 1, 1], [], []>} : vector<16x16xbf16>, vector<16x128xbf16>, vector<16x128xf32> -> vector<16x128xf32>
    %cst_11 = arith.constant dense<0.000000e+00> : vector<16xf32>
    %11 = vector.multi_reduction <add>, %6, %cst_11 [1] : vector<16x128xf32> to vector<16xf32>
    %12 = vector.shape_cast %11 : vector<16xf32> to vector<16x1xf32>
    %13 = arith.mulf %6, %6 : vector<16x128xf32>
    %cst_12 = arith.constant dense<0.000000e+00> : vector<16xf32>
    %14 = vector.multi_reduction <add>, %13, %cst_12 [1] : vector<16x128xf32> to vector<16xf32>
    %15 = vector.shape_cast %14 : vector<16xf32> to vector<16x1xf32>
    %cst_13 = arith.constant dense<0.000000e+00> : vector<16xf32>
    %16 = vector.multi_reduction <add>, %10, %cst_13 [1] : vector<16x128xf32> to vector<16xf32>
    %17 = vector.shape_cast %16 : vector<16xf32> to vector<16x1xf32>
    %18 = arith.mulf %10, %10 : vector<16x128xf32>
    %cst_14 = arith.constant dense<0.000000e+00> : vector<16xf32>
    %19 = vector.multi_reduction <add>, %18, %cst_14 [1] : vector<16x128xf32> to vector<16xf32>
    %20 = vector.shape_cast %19 : vector<16xf32> to vector<16x1xf32>
    %21 = tpu.concatenate %12, %15, %17, %20 in 1 : vector<16x1xf32>, vector<16x1xf32>, vector<16x1xf32>, vector<16x1xf32> -> vector<16x4xf32>
    %c0_15 = arith.constant 0 : index
    %c0_16 = arith.constant 0 : index
    %c0_17 = arith.constant 0 : index
    %22 = vector.load %arg6[%c0_15, %c0_16, %c0_17] : memref<1x16x4xf32, #tpu.memory_space<vmem>>, vector<1x16x4xf32>
    %23 = vector.shape_cast %22 : vector<1x16x4xf32> to vector<16x4xf32>
    %24 = arith.addf %23, %21 : vector<16x4xf32>
    %c0_18 = arith.constant 0 : index
    %c0_19 = arith.constant 0 : index
    %c0_20 = arith.constant 0 : index
    %25 = vector.load %arg6[%c0_18, %c0_19, %c0_20] : memref<1x16x4xf32, #tpu.memory_space<vmem>>, vector<1x16x4xf32>
    %26 = vector.shape_cast %25 : vector<1x16x4xf32> to vector<16x4xf32>
    %27 = vector.shape_cast %24 : vector<16x4xf32> to vector<1x16x4xf32>
    tpu.vector_store %arg6[%c0_18, %c0_19, %c0_20], %27 {strides = array<i32>} : memref<1x16x4xf32, #tpu.memory_space<vmem>>, vector<1x16x4xf32>,
    return
  }
  func.func @transform_0(%arg0: i32, %arg1: i32) -> (i32, i32, i32) {
    %c0_i32 = arith.constant 0 : i32
    %c0_i32_0 = arith.constant 0 : i32
    return %arg0, %c0_i32, %arg1 : i32, i32, i32
  }
  func.func @transform_1(%arg0: i32, %arg1: i32) -> (i32, i32, i32) {
    %c0_i32 = arith.constant 0 : i32
    %c0_i32_0 = arith.constant 0 : i32
    return %arg0, %c0_i32, %arg1 : i32, i32, i32
  }
  func.func @transform_2(%arg0: i32, %arg1: i32) -> (i32, i32) {
    %c0_i32 = arith.constant 0 : i32
    %c0_i32_0 = arith.constant 0 : i32
    %c0_i32_1 = arith.constant 0 : i32
    return %c0_i32, %c0_i32_0 : i32, i32
  }
  func.func @transform_3(%arg0: i32, %arg1: i32) -> (i32, i32) {
    %c0_i32 = arith.constant 0 : i32
    %c0_i32_0 = arith.constant 0 : i32
    %c0_i32_1 = arith.constant 0 : i32
    return %c0_i32, %c0_i32_0 : i32, i32
  }
  func.func @transform_4(%arg0: i32, %arg1: i32) -> (i32, i32, i32) {
    %c0_i32 = arith.constant 0 : i32
    %c0_i32_0 = arith.constant 0 : i32
    %c0_i32_1 = arith.constant 0 : i32
    return %arg0, %c0_i32, %c0_i32_0 : i32, i32, i32
  }
}

</mosaic_0001>

<llo_original>
// kernel: tpu_custom_call.1
$region0: #{tpu_custom_call.1}
  #allocation0 [shape = 'u32[]', space=smem, size = 0x4, offset = 0x4, fixed_abs, tag = 'smem constant byte address 0x4 - core index']
  #allocation1 [shape = 'u32[72,128]{1,0:T(1,128)}', space=vmem, size = 0x9000, scoped, tag = 'internal scratch']
  %s0 = inlined_call_operand.hbm [shape: bf16[2,16,256], index: 0, kind: input, shape index: {}]
  %s1 = inlined_call_operand.hbm [shape: bf16[2,16,256], index: 1, kind: input, shape index: {}]
  %s2 = inlined_call_operand.hbm [shape: bf16[16,16], index: 2, kind: input, shape index: {}]
  %s3 = inlined_call_operand.hbm [shape: bf16[16,16], index: 3, kind: input, shape index: {}]
  %s4 = inlined_call_operand.vmem [shape: f32[2,16,4], index: 4, kind: output, shape index: {}]
  %s5 = sld [smem:[#allocation0]]
  $region69: #{tpu_custom_call.1} parent=0
    _
  %s7 = ssub.s32 1, %s5
  %s8 = scalar_select 0, %s7, %s5
  $region1: #{tpu_custom_call.1} parent=0
    #allocation2 [shape = 'u8[8192]{0}', space=vmem, size = 0x2000, scoped, tag = 'input window, operand 0']
    #allocation3 [shape = 's32[2]{0}', space=sflag, size = 0x8, scoped, tag = 'scoped memory for tpu_custom_call.1']
    #allocation4 [shape = 'u8[8192]{0}', space=vmem, size = 0x2000, scoped, tag = 'input window, operand 1']
    #allocation5 [shape = 's32[2]{0}', space=sflag, size = 0x8, scoped, tag = 'scoped memory for tpu_custom_call.1']
    #allocation6 [shape = 'u8[4096]{0}', space=vmem, size = 0x1000, scoped, tag = 'input window, operand 2, single buffered']
    #allocation7 [shape = 'u8[4096]{0}', space=vmem, size = 0x1000, scoped, tag = 'input window, operand 3, single buffered']
    #allocation8 [shape = 's32[1]{0}', space=sflag, size = 0x4, scoped, tag = 'scoped memory for tpu_custom_call.1']
    %9 = vsyncpa [#allocation3], 0
    %s10 = scalar_lea.sflag [#allocation3], 1
    %11 = vsyncpa %s10, 0
    %12 = vsyncpa [#allocation5], 0
    %s13 = scalar_lea.sflag [#allocation5], 1
    %14 = vsyncpa %s13, 0
    %15 = vsyncpa [#allocation8], 0
    loop: start=0, step=1, limit=6
    $region2: #{tpu_custom_call.1} parent=1 // loop_pre_header
      _
    $region3: #{tpu_custom_call.1} parent=1 // loop_header
      %s17 = sphi 0, %s21
      %p18 = scmp.ge.s32.totalorder %s17, 6
      %s24 = sphi 0, %s36
      %s25 = sphi 0, %s32
      %s26 = sphi 0, %s24
      %s27 = sphi 0, %s25
      %s28 = sphi 0, %s26
      %s29 = sphi 0, %s27
      %s41 = sphi 0, %s43
      %s44 = sphi 0, %s41
      %s45 = sphi 0, %s44
      %s61 = sphi 0, %s45
      %s69 = sphi 0, %s71
      %s72 = sphi 0, %s69
      %s73 = sphi 0, %s72
      %s89 = sphi 0, %s73
      %s93 = sphi 0, %s93
      %s95 = sphi 0, %s93
      %s96 = sphi 0, %s95
      %s110 = sphi 0, %s96
      %s114 = sphi 0, %s114
      %s116 = sphi 0, %s114
      %s117 = sphi 0, %s116
      %s131 = sphi 0, %s117
      %s137 = sphi 0, %s139
      %s140 = sphi 0, %s137
      %s141 = sphi 0, %s140
      %s157 = sphi 0, %s141
    $region4: #{tpu_custom_call.1} parent=1 // loop_header_branch
      %20 = sbr.rel (%p18) target = $region8
    $region5: #{tpu_custom_call.1} parent=1 // loop_body
      %s22 = ssub.s32 %s17, 1
      %s23 = ssub.s32 %s17, 2
      %s30 = sadd.s32 1, %s25
      %p31 = scmp.ge.s32.totalorder %s30, 2
      %s32 = scalar_select %p31, 0, %s30
      %s33 = sadd.s32 1, %s24
      %s34 = scalar_select %p31, %s33, %s24
      %p35 = scmp.ge.s32.totalorder %s34, 2
      %s36 = scalar_select %p35, 0, %s34
      %s37 = ssub.s32 %s24, %s36
      %s38 = ssub.s32 %s25, %s32
      %s39 = sor.u32 %s37, %s38
      %p40 = scmp.eq.s32.totalorder %s39, 0
      %s42 = sadd.s32 %s41, 1
      %s43 = scalar_select %p40, %s41, %s42
      %p46 = pneg %p40
      %p47 = scmp.eq.s32.totalorder %s17, 3
      %p48 = por %p46, %p47
      %p49 = scmp.ne.s32.totalorder %s41, %s44
      %p50 = scmp.eq.s32.totalorder %s17, 0
      %p51 = por %p49, %p50
      %p52 = scmp.ne.s32.totalorder %s41, %s44
      %p53 = scmp.eq.s32.totalorder %s22, 3
      %p54 = por %p52, %p53
      %p55 = scmp.ne.s32.totalorder %s44, %s45
      %p56 = scmp.eq.s32.totalorder %s22, 0
      %p57 = por %p55, %p56
      %p58 = scmp.ne.s32.totalorder %s44, %s45
      %p59 = scmp.eq.s32.totalorder %s23, 3
      %p60 = por %p58, %p59
      %p62 = scmp.ne.s32.totalorder %s45, %s61
      %p63 = scmp.eq.s32.totalorder %s23, 0
      %p64 = por %p62, %p63
      %s65 = ssub.s32 %s24, %s36
      %s66 = ssub.s32 %s25, %s32
      %s67 = sor.u32 %s65, %s66
      %p68 = scmp.eq.s32.totalorder %s67, 0
      %s70 = sadd.s32 %s69, 1
      %s71 = scalar_select %p68, %s69, %s70
      %p74 = pneg %p68
      %p75 = scmp.eq.s32.totalorder %s17, 3
      %p76 = por %p74, %p75
      %p77 = scmp.ne.s32.totalorder %s69, %s72
      %p78 = scmp.eq.s32.totalorder %s17, 0
      %p79 = por %p77, %p78
      %p80 = scmp.ne.s32.totalorder %s69, %s72
      %p81 = scmp.eq.s32.totalorder %s22, 3
      %p82 = por %p80, %p81
      %p83 = scmp.ne.s32.totalorder %s72, %s73
      %p84 = scmp.eq.s32.totalorder %s22, 0
      %p85 = por %p83, %p84
      %p86 = scmp.ne.s32.totalorder %s72, %s73
      %p87 = scmp.eq.s32.totalorder %s23, 3
      %p88 = por %p86, %p87
      %p90 = scmp.ne.s32.totalorder %s73, %s89
      %p91 = scmp.eq.s32.totalorder %s23, 0
      %p92 = por %p90, %p91
      %s94 = sadd.s32 %s93, 1
      %p97 = scmp.eq.s32.totalorder %s17, 3
      %p98 = scmp.ne.s32.totalorder %s93, %s95
      %p99 = scmp.eq.s32.totalorder %s17, 0
      %p100 = por %p98, %p99
      %p101 = scmp.ne.s32.totalorder %s93, %s95
      %p102 = scmp.eq.s32.totalorder %s22, 3
      %p103 = por %p101, %p102
      %p104 = scmp.ne.s32.totalorder %s95, %s96
      %p105 = scmp.eq.s32.totalorder %s22, 0
      %p106 = por %p104, %p105
      %p107 = scmp.ne.s32.totalorder %s95, %s96
      %p108 = scmp.eq.s32.totalorder %s23, 3
      %p109 = por %p107, %p108
      %p111 = scmp.ne.s32.totalorder %s96, %s110
      %p112 = scmp.eq.s32.totalorder %s23, 0
      %p113 = por %p111, %p112
      %s115 = sadd.s32 %s114, 1
      %p118 = scmp.eq.s32.totalorder %s17, 3
      %p119 = scmp.ne.s32.totalorder %s114, %s116
      %p120 = scmp.eq.s32.totalorder %s17, 0
      %p121 = por %p119, %p120
      %p122 = scmp.ne.s32.totalorder %s114, %s116
      %p123 = scmp.eq.s32.totalorder %s22, 3
      %p124 = por %p122, %p123
      %p125 = scmp.ne.s32.totalorder %s116, %s117
      %p126 = scmp.eq.s32.totalorder %s22, 0
      %p127 = por %p125, %p126
      %p128 = scmp.ne.s32.totalorder %s116, %s117
      %p129 = scmp.eq.s32.totalorder %s23, 3
      %p130 = por %p128, %p129
      %p132 = scmp.ne.s32.totalorder %s117, %s131
      %p133 = scmp.eq.s32.totalorder %s23, 0
      %p134 = por %p132, %p133
      %s135 = ssub.s32 %s24, %s36
      %p136 = scmp.eq.s32.totalorder %s135, 0
      %s138 = sadd.s32 %s137, 1
      %s139 = scalar_select %p136, %s137, %s138
      %p142 = pneg %p136
      %p143 = scmp.eq.s32.totalorder %s17, 3
      %p144 = por %p142, %p143
      %p145 = scmp.ne.s32.totalorder %s137, %s140
      %p146 = scmp.eq.s32.totalorder %s17, 0
      %p147 = por %p145, %p146
      %p148 = scmp.ne.s32.totalorder %s137, %s140
      %p149 = scmp.eq.s32.totalorder %s22, 3
      %p150 = por %p148, %p149
      %p151 = scmp.ne.s32.totalorder %s140, %s141
      %p152 = scmp.eq.s32.totalorder %s22, 0
      %p153 = por %p151, %p152
      %p154 = scmp.ne.s32.totalorder %s140, %s141
      %p155 = scmp.eq.s32.totalorder %s23, 3
      %p156 = por %p154, %p155
      %p158 = scmp.ne.s32.totalorder %s141, %s157
      %p159 = scmp.eq.s32.totalorder %s23, 0
      %p160 = por %p158, %p159
      %p161 = scmp.le.s32.totalorder 1, %s17
      %p162 = scmp.lt.s32.totalorder %s17, 5
      %p163 = pnand %p161, %p162
      %p164 = pneg %p163
      // Predicated region
      $region9: #{tpu_custom_call.1} parent=5 // pred_check
        _
      $region10: #{tpu_custom_call.1} parent=5 // pred_check_branch
        %166 = sbr.rel (%p163) target = $region12
      $region11: #{tpu_custom_call.1} parent=5 // pred_region
        %s167 = ssub.s32 %s17, 1
        // Predicated region
        $region13: #{tpu_custom_call.1} parent=11 // pred_check
          %p168 = pneg %p106
        $region14: #{tpu_custom_call.1} parent=11 // pred_check_branch
          %170 = sbr.rel (%p168) target = $region16
        $region15: #{tpu_custom_call.1} parent=11 // pred_region
          %172 = vsyncadd [#allocation5], 0
          %s173 = sshll.u32 %s2, 4
          %s174 = int_to_ptr.hbm [resolvable:$true] %s173
          %s175 = sshll.u32 [#allocation6], 4
          %s176 = int_to_ptr.vmem [resolvable:$true] %s175
          %181 = dma.hbm_to_vmem [thread:$0]  %s174, 128, %s176, [#allocation5], 64, 64, 4
        $region16: #{tpu_custom_call.1} parent=11 // pred_fallthru
          _
        // Predicated region
        $region17: #{tpu_custom_call.1} parent=11 // pred_check
          %p182 = pneg %p127
        $region18: #{tpu_custom_call.1} parent=11 // pred_check_branch
          %184 = sbr.rel (%p182) target = $region20
        $region19: #{tpu_custom_call.1} parent=11 // pred_region
          %186 = vsyncadd [#allocation8], 0
          %s187 = sshll.u32 %s3, 4
          %s188 = int_to_ptr.hbm [resolvable:$true] %s187
          %s189 = sshll.u32 [#allocation7], 4
          %s190 = int_to_ptr.vmem [resolvable:$true] %s189
          %195 = dma.hbm_to_vmem [thread:$0]  %s188, 128, %s190, [#allocation8], 64, 64, 4
        $region20: #{tpu_custom_call.1} parent=11 // pred_fallthru
          _
      $region12: #{tpu_custom_call.1} parent=5 // pred_fallthru
        _
      %p196 = scmp.lt.s32.totalorder %s17, 4
      // Predicated region
      $region21: #{tpu_custom_call.1} parent=5 // pred_check
        %p197 = pneg %p196
      $region22: #{tpu_custom_call.1} parent=5 // pred_check_branch
        %199 = sbr.rel (%p197) target = $region24
      $region23: #{tpu_custom_call.1} parent=5 // pred_region
        // Predicated region
        $region25: #{tpu_custom_call.1} parent=23 // pred_check
          %p200 = pneg %p51
        $region26: #{tpu_custom_call.1} parent=23 // pred_check_branch
          %202 = sbr.rel (%p200) target = $region28
        $region27: #{tpu_custom_call.1} parent=23 // pred_region
          %s203 = sand.u32 %s41, 1
          %s204 = scalar_lea.sflag [#allocation3], %s203
          %s205 = sand.u32 %s41, 1
          %s206 = smul.addr %s205, 8
          %s207 = scalar_lea.vmem [#allocation2], %s206
          %209 = vsyncadd %s204, 0
          %s210 = smul.addr %s24, 4
          %s211 = sadd.s32 %s25, %s210
          %s212 = smul.addr %s211, 4
          %s213 = scalar_lea.hbm %s0, %s212
          %s214 = sshll.u32 %s213, 4
          %s215 = int_to_ptr.hbm [resolvable:$true] %s214
          %s216 = sshll.u32 %s207, 4
          %s217 = int_to_ptr.vmem [resolvable:$true] %s216
          %222 = dma.hbm_to_vmem [thread:$0]  %s215, 128, %s217, %s204, 128, 64, 4
        $region28: #{tpu_custom_call.1} parent=23 // pred_fallthru
          _
        // Predicated region
        $region29: #{tpu_custom_call.1} parent=23 // pred_check
          %p223 = pneg %p79
        $region30: #{tpu_custom_call.1} parent=23 // pred_check_branch
          %225 = sbr.rel (%p223) target = $region32
        $region31: #{tpu_custom_call.1} parent=23 // pred_region
          %s226 = sand.u32 %s17, 1
          %s227 = scalar_lea.sflag [#allocation5], %s226
          %s228 = sand.u32 %s69, 1
          %s229 = smul.addr %s228, 8
          %s230 = scalar_lea.vmem [#allocation4], %s229
          %232 = vsyncadd %s227, 0
          %s233 = smul.addr %s24, 4
          %s234 = sadd.s32 %s25, %s233
          %s235 = smul.addr %s234, 4
          %s236 = scalar_lea.hbm %s1, %s235
          %s237 = sshll.u32 %s236, 4
          %s238 = int_to_ptr.hbm [resolvable:$true] %s237
          %s239 = sshll.u32 %s230, 4
          %s240 = int_to_ptr.vmem [resolvable:$true] %s239
          %245 = dma.hbm_to_vmem [thread:$0]  %s238, 128, %s240, %s227, 128, 64, 4
        $region32: #{tpu_custom_call.1} parent=23 // pred_fallthru
          _
      $region24: #{tpu_custom_call.1} parent=5 // pred_fallthru
        _
      %p246 = scmp.le.s32.totalorder 1, %s17
      %p247 = scmp.lt.s32.totalorder %s17, 5
      %p248 = pnand %p246, %p247
      %p249 = pneg %p248
      // Predicated region
      $region33: #{tpu_custom_call.1} parent=5 // pred_check
        _
      $region34: #{tpu_custom_call.1} parent=5 // pred_check_branch
        %251 = sbr.rel (%p248) target = $region36
      $region35: #{tpu_custom_call.1} parent=5 // pred_region
        %s252 = ssub.s32 %s17, 1
        %s253 = sand.u32 %s44, 1
        %s254 = scalar_lea.sflag [#allocation3], %s253
        %s255 = sand.u32 %s44, 1
        %s256 = smul.addr %s255, 8
        %s257 = scalar_lea.vmem [#allocation2], %s256
        // Predicated region
        $region37: #{tpu_custom_call.1} parent=35 // pred_check
          %p258 = pneg %p57
        $region38: #{tpu_custom_call.1} parent=35 // pred_check_branch
          %260 = sbr.rel (%p258) target = $region40
        $region39: #{tpu_custom_call.1} parent=35 // pred_region
          %262 = dma.done %s254, 128
        $region40: #{tpu_custom_call.1} parent=35 // pred_fallthru
          _
        %s263 = sand.u32 %s22, 1
        %s264 = scalar_lea.sflag [#allocation5], %s263
        %s265 = sand.u32 %s72, 1
        %s266 = smul.addr %s265, 8
        %s267 = scalar_lea.vmem [#allocation4], %s266
        // Predicated region
        $region41: #{tpu_custom_call.1} parent=35 // pred_check
          %p268 = pneg %p85
        $region42: #{tpu_custom_call.1} parent=35 // pred_check_branch
          %270 = sbr.rel (%p268) target = $region44
        $region43: #{tpu_custom_call.1} parent=35 // pred_region
          %272 = dma.done %s264, 128
        $region44: #{tpu_custom_call.1} parent=35 // pred_fallthru
          _
        // Predicated region
        $region45: #{tpu_custom_call.1} parent=35 // pred_check
          %p273 = pneg %p106
        $region46: #{tpu_custom_call.1} parent=35 // pred_check_branch
          %275 = sbr.rel (%p273) target = $region48
        $region47: #{tpu_custom_call.1} parent=35 // pred_region
          %277 = dma.done [#allocation5], 128
        $region48: #{tpu_custom_call.1} parent=35 // pred_fallthru
          _
        // Predicated region
        $region49: #{tpu_custom_call.1} parent=35 // pred_check
          %p278 = pneg %p127
        $region50: #{tpu_custom_call.1} parent=35 // pred_check_branch
          %280 = sbr.rel (%p278) target = $region52
        $region51: #{tpu_custom_call.1} parent=35 // pred_region
          %282 = dma.done [#allocation8], 128
        $region52: #{tpu_custom_call.1} parent=35 // pred_fallthru
          _
        %s283 = sand.u32 %s44, 1
        %s284 = scalar_lea.sflag [#allocation3], %s283
        %s285 = sand.u32 %s44, 1
        %s286 = smul.addr %s285, 8
        %s287 = scalar_lea.vmem [#allocation2], %s286
        %p288 = pneg %p57
        %p289 = pneg %p54
        %s290 = sand.u32 %s22, 1
        %s291 = scalar_lea.sflag [#allocation5], %s290
        %s292 = sand.u32 %s72, 1
        %s293 = smul.addr %s292, 8
        %s294 = scalar_lea.vmem [#allocation4], %s293
        %p295 = pneg %p85
        %p296 = pneg %p82
        %p297 = pneg %p106
        %p298 = pneg %p103
        %p299 = pneg %p127
        %p300 = pneg %p124
        %p301 = pneg %p153
        %p302 = pneg %p150
        %p303 = scmp.lt.s32.totalorder %s26, 1
        %s304 = scalar_select %p303, %s26, 1
        %s305 = smul.addr %s304, 2
        %s306 = smul.addr %s305, 8
        %s307 = scalar_lea.vmem %s4, %s306
        %p308 = scmp.lt.s32.totalorder %s26, 1
        %s309 = scalar_select %p308, %s26, 1
        %s310 = smul.addr %s309, 2
        %s311 = smul.addr %s310, 8
        %s312 = scalar_lea.vmem %s4, %s311
        %p314 = scmp.eq.s32.totalorder %s27, 0
        // Predicated region
        $region53: #{tpu_custom_call.1} parent=35 // pred_check
          %p315 = pneg %p314
        $region54: #{tpu_custom_call.1} parent=35 // pred_check_branch
          %317 = sbr.rel (%p315) target = $region56
        $region55: #{tpu_custom_call.1} parent=35 // pred_region
          %vm318 = vcmask 31744
          %319 = vst.msk [vmem:[%s312] sm:$0xff] %vm318, 0.0
          %320 = vst.msk [vmem:[%s312 + $0x8] sm:$0xff] %vm318, 0.0
        $region56: #{tpu_custom_call.1} parent=35 // pred_fallthru
          _
        %v321 = vld [vmem:[#allocation6] sm:$0xf]
        %v322 = vld [vmem:[#allocation6 + $0x4] sm:$0xf]
        %v323 = vld [vmem:[%s257] sm:$0xf]
        %v324 = vld [vmem:[%s257 + $0x4] sm:$0xf]
        %v327 = vunpack.c.l.b16 %v321
        %v328 = vunpack.c.l.b16 %v322
        %v329 = vpack.c.b16 %v328, %v327
        %v332 = vunpack.c.l.b16 %v323
        %v333 = vunpack.c.l.b16 %v324
        %v334 = vpack.c.b16 %v333, %v332
        %vm336 = vcmask 130048
        %v338 = vsel %vm336, %v329, 0
        %340 = vmatpush.bf16.msra.mxu0 0
        %341 = vmatpush.bf16.msra.mxu0 0
        %342 = vmatpush.bf16.msra.mxu0 0
        %343 = vmatpush.bf16.msra.mxu0 0
        %344 = vmatpush.bf16.msra.mxu0 0
        %345 = vmatpush.bf16.msra.mxu0 0
        %346 = vmatpush.bf16.msra.mxu0 0
        %347 = vmatpush.bf16.msra.mxu0 %v334
        %348 = vmatmul.bf16.gmra.mxu0 %v338
        %v349 = vpop.f32.mrf.mxu0
        %v350 = vadd.f32 0.0, %v349
        %v351 = vpop.f32.mrf.mxu0
        %v352 = vadd.f32 0.0, %v351
        %353 = vdwg.mxu0
        %v354 = vld [vmem:[#allocation7] sm:$0xf]
        %v355 = vld [vmem:[#allocation7 + $0x4] sm:$0xf]
        %v356 = vld [vmem:[%s267] sm:$0xf]
        %v357 = vld [vmem:[%s267 + $0x4] sm:$0xf]
        %v360 = vunpack.c.l.b16 %v354
        %v361 = vunpack.c.l.b16 %v355
        %v362 = vpack.c.b16 %v361, %v360
        %v365 = vunpack.c.l.b16 %v356
        %v366 = vunpack.c.l.b16 %v357
        %v367 = vpack.c.b16 %v366, %v365
        %v370 = vsel %vm336, %v362, 0
        %372 = vmatpush.bf16.msra.mxu0 0
        %373 = vmatpush.bf16.msra.mxu0 0
        %374 = vmatpush.bf16.msra.mxu0 0
        %375 = vmatpush.bf16.msra.mxu0 0
        %376 = vmatpush.bf16.msra.mxu0 0
        %377 = vmatpush.bf16.msra.mxu0 0
        %378 = vmatpush.bf16.msra.mxu0 0
        %379 = vmatpush.bf16.msra.mxu0 %v367
        %380 = vmatmul.bf16.gmra.mxu0 %v370
        %v381 = vpop.f32.mrf.mxu0
        %v382 = vadd.f32 0.0, %v381
        %v383 = vpop.f32.mrf.mxu0
        %v384 = vadd.f32 0.0, %v383
        %385 = vdwg.mxu0
        %386 = vadd.xlane.f32.xlu0 %v350
        %v387 = vpop.xlane.xlu0 %386
        %388 = vadd.xlane.f32.xlu0 %v352
        %v389 = vpop.xlane.xlu0 %388
        %v390 = vmul.f32 %v350, %v350
        %v391 = vmul.f32 %v352, %v352
        %392 = vadd.xlane.f32.xlu0 %v390
        %v393 = vpop.xlane.xlu0 %392
        %394 = vadd.xlane.f32.xlu0 %v391
        %v395 = vpop.xlane.xlu0 %394
        %396 = vadd.xlane.f32.xlu0 %v382
        %v397 = vpop.xlane.xlu0 %396
        %398 = vadd.xlane.f32.xlu0 %v384
        %v399 = vpop.xlane.xlu0 %398
        %v400 = vmul.f32 %v382, %v382
        %v401 = vmul.f32 %v384, %v384
        %402 = vadd.xlane.f32.xlu0 %v400
        %v403 = vpop.xlane.xlu0 %402
        %404 = vadd.xlane.f32.xlu0 %v401
        %v405 = vpop.xlane.xlu0 %404
        %vm406 = vcmask 7168
        %v407 = vsel %vm406, %v387, %v393
        %v408 = vsel %vm406, %v389, %v395
        %vm409 = vcmask 15360
        %v410 = vsel %vm409, %v407, %v397
        %v411 = vsel %vm409, %v408, %v399
        %vm412 = vcmask 23552
        %v413 = vsel %vm412, %v410, %v403
        %v414 = vsel %vm412, %v411, %v405
        %v415 = vld [vmem:[%s312] sm:$0xff]
        %v416 = vld [vmem:[%s312 + $0x8] sm:$0xff]
        %v417 = vadd.f32 %v415, %v413
        %v418 = vadd.f32 %v416, %v414
        %vm419 = vcmask 31744
        %420 = vst.msk [vmem:[%s312] sm:$0xff] %vm419, %v417
        %421 = vst.msk [vmem:[%s312 + $0x8] sm:$0xff] %vm419, %v418
        %p422 = scmp.lt.s32.totalorder %s26, 1
        %s423 = scalar_select %p422, %s26, 1
        %s424 = smul.addr %s423, 2
        %s425 = smul.addr %s424, 8
        %s426 = scalar_lea.vmem %s4, %s425
        // Predicated region
        $region57: #{tpu_custom_call.1} parent=35 // pred_check
          %p427 = pneg %p150
        $region58: #{tpu_custom_call.1} parent=35 // pred_check_branch
          %429 = sbr.rel (%p427) target = $region60
        $region59: #{tpu_custom_call.1} parent=35 // pred_region
          _
        $region60: #{tpu_custom_call.1} parent=35 // pred_fallthru
          _
      $region36: #{tpu_custom_call.1} parent=5 // pred_fallthru
        _
      %p430 = scmp.le.s32.totalorder 2, %s17
      // Predicated region
      $region61: #{tpu_custom_call.1} parent=5 // pred_check
        %p431 = pneg %p430
      $region62: #{tpu_custom_call.1} parent=5 // pred_check_branch
        %433 = sbr.rel (%p431) target = $region64
      $region63: #{tpu_custom_call.1} parent=5 // pred_region
        %s434 = ssub.s32 %s17, 2
        // Predicated region
        $region65: #{tpu_custom_call.1} parent=63 // pred_check
          %p435 = pneg %p156
        $region66: #{tpu_custom_call.1} parent=63 // pred_check_branch
          %437 = sbr.rel (%p435) target = $region68
        $region67: #{tpu_custom_call.1} parent=63 // pred_region
          %p438 = scmp.lt.s32.totalorder %s28, 1
          %s439 = scalar_select %p438, %s28, 1
          %s440 = smul.addr %s439, 2
          %s441 = smul.addr %s440, 8
          %s442 = scalar_lea.vmem %s4, %s441
        $region68: #{tpu_custom_call.1} parent=63 // pred_fallthru
          _
      $region64: #{tpu_custom_call.1} parent=5 // pred_fallthru
        _
    $region6: #{tpu_custom_call.1} parent=1 // loop_footer
      %s21 = sadd.s32 1, %s17
    $region7: #{tpu_custom_call.1} parent=1 // loop_footer_branch
      %16 = sbr.rel target = $region3
    $region8: #{tpu_custom_call.1} parent=1 // loop_exit
      _
    %443 = vsyncpa [#allocation3], 1
    %s444 = scalar_lea.sflag [#allocation3], 1
    %445 = vsyncpa %s444, 1
    %446 = vsyncpa [#allocation5], 1
    %s447 = scalar_lea.sflag [#allocation5], 1
    %448 = vsyncpa %s447, 1
    %449 = vsyncpa [#allocation8], 1

</llo_original>
